<compile_context>
chip_gen: v7x
topology: tpu7x:2x2x1
jax: 0.10.0
libtpu: 0.0.40
codegen_flags: <defaults>
</compile_context>

<pallas_src>
import math
from functools import partial

import numpy as np
import jax
import jax.numpy as jnp
from jax import lax
from jax.experimental import pallas as pl
from jax.experimental.pallas import tpu as pltpu


def _mask_tensor_np(order, n):
    """Off-diagonal mask of an order-`order` tensor: shape (n,)*order, True where all
    indices are pairwise distinct. Computed with numpy at trace time (constant)."""
    if order <= 1:
        return np.ones((n,) * order, dtype=np.float32)
    idx = np.indices((n,) * order)
    m = np.ones((n,) * order, dtype=bool)
    for i in range(order):
        for j in range(i + 1, order):
            m &= idx[i] != idx[j]
    return m.astype(np.float32)


def _pick_batch_block(batch, max_tb=8):
    """Largest divisor of `batch` (<= max_tb) that still leaves >= 2 grid steps when
    batch >= 2, so both v7x TensorCores get work along the 'parallel' batch axis."""
    best = 1
    min_steps = 2 if batch >= 2 else 1
    for tb in range(1, min(batch, max_tb) + 1):
        if batch % tb == 0 and batch // tb >= min_steps:
            best = tb
    return best


def _attn_coef_kernel(struct_ref, m_ref, q_ref, k_ref, o_ref, *, scale, dh):
    # struct_ref: [Nq, Nk]        f32 {0,1}  constant index_map -> VMEM-resident, no per-step rebuild
    # m_ref     : [TB, 1, Nq+Nk]  f32        packed q_mask | k_mask (lane-major)
    # q_ref     : [TB, Nq, H*dh]  bf16       natural layout, heads are lane slices
    # k_ref     : [TB, Nk, H*dh]  bf16
    # o_ref     : [H, TB, Nq, Nk] f32
    n_heads = o_ref.shape[0]
    nq = q_ref.shape[1]
    nk = k_ref.shape[1]

    m = m_ref[...]                                    # [TB, 1, Nq+Nk]
    qm_f = m[:, 0, :nq]                               # [TB, Nq]
    km_f = m[:, 0, nq:]                               # [TB, Nk]

    # Batch-dependent mask only (implicit broadcasting, nothing materialized by hand);
    # the structural part comes in precomputed.
    mask_f = struct_ref[...][None] * qm_f[:, :, None] * km_f[:, None, :]   # [TB, Nq, Nk]
    mask = mask_f > jnp.float32(0.5)
    # Rows with no admissible key (structurally, q-masked, or k-masked) -> all-zero output.
    row_valid = jnp.max(mask_f, axis=-1, keepdims=True) > jnp.float32(0.5)  # [TB, Nq, 1]

    neg = jnp.float32(-1e30)
    fscale = jnp.float32(scale)

    # Static unroll over heads: all heads reuse the same DMA'd tiles and the same mask.
    for h in range(n_heads):
        qh = q_ref[:, :, h * dh:(h + 1) * dh]         # [TB, Nq, dh] bf16 lane slice
        kh = k_ref[:, :, h * dh:(h + 1) * dh]         # [TB, Nk, dh] bf16 lane slice
        s = lax.dot_general(qh, kh, (((2,), (2,)), ((0,), (0,))),
                            preferred_element_type=jnp.float32)            # [TB, Nq, Nk] f32
        s = jnp.where(mask, s * fscale, neg)
        # Masked entries underflow exp() to exactly 0 (unless the whole row is masked,
        # which row_valid handles below) -> no second full-size select needed.
        e = jnp.exp(s - jnp.max(s, axis=-1, keepdims=True))
        denom = jnp.sum(e, axis=-1, keepdims=True)    # >= 1 (the row max contributes exp(0))
        inv = pl.reciprocal(denom, approx=True)       # EUP slot, frees VALU
        alpha = e * jnp.where(row_valid, inv, jnp.float32(0.0))
        o_ref[h] = alpha                              # [TB, Nq, Nk]


class AttnCoef:
    """JAX/Pallas port of hot_pytorch AttnCoef (tensor-query and vector-query branches)."""

    def __init__(self, ord_q, ord_k, dim_qk, n_heads):
        self.ord_q = ord_q
        self.ord_k = ord_k
        self.dim_qk = dim_qk
        self.dim_qk_head = dim_qk // n_heads if dim_qk >= n_heads else 1
        self.n_heads = n_heads

    def __call__(self, q_A, q_mask, k_A, k_mask):
        dh = self.dim_qk_head
        assert self.dim_qk % dh == 0
        H = self.dim_qk // dh
        bsize = k_A.shape[0]
        n = k_A.shape[1]
        Nk = n ** self.ord_k

        vector_query = (q_A.ndim == 2)          # query: Tensor([B, Dqk]) special case
        if vector_query:
            ord_q_eff, Nq = 0, 1
            q_mask_f = jnp.ones((bsize, 1), dtype=jnp.float32)
            q_flat = q_A.reshape(bsize, 1, self.dim_qk)
        else:
            ord_q_eff, Nq = self.ord_q, n ** self.ord_q
            q_mask_f = q_mask.reshape(bsize, Nq).astype(jnp.float32)
            q_flat = q_A.reshape(bsize, Nq, self.dim_qk)     # leading-dim merge only (free)
        k_flat = k_A.reshape(bsize, Nk, self.dim_qk)
        k_mask_f = k_mask.reshape(bsize, Nk).astype(jnp.float32)

        # bf16 MXU operands (halve q/k DMA bytes); softmax math stays f32 in-kernel.
        q_bf = q_flat.astype(jnp.bfloat16)
        k_bf = k_flat.astype(jnp.bfloat16)

        # Structural off-diagonal mask: trace-time constant, resident in VMEM.
        struct = jnp.asarray(
            _mask_tensor_np(ord_q_eff + self.ord_k, n).reshape(Nq, Nk), dtype=jnp.float32)

        # Per-batch masks packed into one small lane-major input stream.
        packed_mask = jnp.concatenate([q_mask_f, k_mask_f], axis=-1).reshape(bsize, 1, Nq + Nk)

        TB = _pick_batch_block(bsize)
        grid = (bsize // TB,)
        scale = 1.0 / math.sqrt(dh)

        out = pl.pallas_call(
            partial(_attn_coef_kernel, scale=scale, dh=dh),
            out_shape=jax.ShapeDtypeStruct((H, bsize, Nq, Nk), jnp.float32),
            grid=grid,
            in_specs=[
                pl.BlockSpec((Nq, Nk), lambda b: (0, 0)),            # structural mask (resident)
                pl.BlockSpec((TB, 1, Nq + Nk), lambda b: (b, 0, 0)),  # packed q/k masks
                pl.BlockSpec((TB, Nq, H * dh), lambda b: (b, 0, 0)),  # q, natural layout, bf16
                pl.BlockSpec((TB, Nk, H * dh), lambda b: (b, 0, 0)),  # k, natural layout, bf16
            ],
            out_specs=pl.BlockSpec((H, TB, Nq, Nk), lambda b: (0, b, 0, 0)),
            compiler_params=pltpu.CompilerParams(
                dimension_semantics=("parallel",)),
        )(struct, packed_mask, q_bf, k_bf)

        if vector_query:
            out = out[:, :, 0, :]   # [H, B, Nk]
        return out


def _reference(q_A, q_mask, k_A, k_mask, ord_q, ord_k, dim_qk, n_heads):
    """Pure-JAX f32 replica of the PyTorch math (for validation)."""
    dh = dim_qk // n_heads if dim_qk >= n_heads else 1
    H = dim_qk // dh
    bsize, n = k_A.shape[0], k_A.shape[1]
    Nk = n ** ord_k
    if q_A.ndim == 2:
        ord_q_eff, Nq = 0, 1
        q_mask_b = jnp.ones((bsize, 1), dtype=bool)
    else:
        ord_q_eff, Nq = ord_q, n ** ord_q
        q_mask_b = q_mask.reshape(bsize, Nq)
    q_ = jnp.transpose(q_A.reshape(bsize, Nq, H, dh), (2, 0, 1, 3))
    k_ = jnp.transpose(k_A.reshape(bsize, Nk, H, dh), (2, 0, 1, 3))
    k_mask_b = k_mask.reshape(bsize, Nk)
    M = jnp.asarray(_mask_tensor_np(ord_q_eff + ord_k, n).reshape(Nq, Nk) > 0.5)
    att = M[None] & (q_mask_b[:, :, None] & k_mask_b[:, None, :])
    sdp = jnp.einsum('hbkd,hbld->hbkl', q_, k_) / math.sqrt(dh)
    sdp = jnp.where(att[None], sdp, -jnp.inf)
    alpha = jax.nn.softmax(sdp, axis=3)
    alpha = jnp.where(att[None], alpha, 0.0)   # also zeroes NaN rows (fully masked)
    if q_A.ndim == 2:
        alpha = alpha[:, :, 0, :]
    return alpha


if __name__ == "__main__":
    key = jax.random.PRNGKey(0)
    B, n, dim_qk, n_heads = 2, 16, 32, 4
    ord_q, ord_k = 1, 1

    k1, k2, k3, k4, k5 = jax.random.split(key, 5)
    q_A = jax.random.normal(k1, (B, n, dim_qk), dtype=jnp.float32)
    k_A = jax.random.normal(k2, (B, n, dim_qk), dtype=jnp.float32)
    q_mask = jax.random.uniform(k3, (B, n)) < 0.8
    k_mask = jax.random.uniform(k4, (B, n)) < 0.8

    mod = AttnCoef(ord_q, ord_k, dim_qk, n_heads)

    # bf16 matmul operands + approx reciprocal vs. the pure-f32 reference:
    # softmax outputs are in [0, 1]; 2e-2 absolute comfortably bounds the bf16 logit
    # perturbation while still catching any masking / head-slicing / layout bug.
    TOL = 2e-2

    # tensor-query branch: query Batch([B, n, Dqk]) -> alpha [H, B, n, n]
    alpha = jax.block_until_ready(mod(q_A, q_mask, k_A, k_mask))
    ref = _reference(q_A, q_mask, k_A, k_mask, ord_q, ord_k, dim_qk, n_heads)
    assert alpha.shape == (n_heads, B, n, n)
    assert np.allclose(np.asarray(alpha), np.asarray(ref), atol=TOL), "tensor-query mismatch"

    # vector-query branch: query Tensor([B, Dqk]) -> alpha [H, B, n]
    q_vec = jax.random.normal(k5, (B, dim_qk), dtype=jnp.float32)
    alpha_v = jax.block_until_ready(mod(q_vec, None, k_A, k_mask))
    ref_v = _reference(q_vec, None, k_A, k_mask, ord_q, ord_k, dim_qk, n_heads)
    assert alpha_v.shape == (n_heads, B, n)
    assert np.allclose(np.asarray(alpha_v), np.asarray(ref_v), atol=TOL), "vector-query mismatch"

    print("KERNEL_OK")
</pallas_src>

<mosaic_0001>
module attributes {stable_mosaic.version = 11 : i64} {
  func.func @_attn_coef_kernel(%arg0: i32, %arg1: memref<16x16xf32, #tpu.memory_space<vmem>>, %arg2: memref<1x1x32xf32, #tpu.memory_space<vmem>>, %arg3: memref<1x16x32xbf16, #tpu.memory_space<vmem>>, %arg4: memref<1x16x32xbf16, #tpu.memory_space<vmem>>, %arg5: memref<4x1x16x16xf32, #tpu.memory_space<vmem>>) attributes {dimension_semantics = [#tpu.dimension_semantics<parallel>], iteration_bounds = array<i64: 2>, scalar_prefetch = 0 : i64, scratch_operands = 0 : i64, tpu.core_type = #tpu.core_type<tc>, window_params = [{pipeline_mode = #tpu.pipeline_mode<synchronous>, transform_indices = @transform_0, window_bounds = array<i64: 16, 16>}, {transform_indices = @transform_1, window_bounds = array<i64: 1, 1, 32>}, {transform_indices = @transform_2, window_bounds = array<i64: 1, 16, 32>}, {transform_indices = @transform_3, window_bounds = array<i64: 1, 16, 32>}, {transform_indices = @transform_4, window_bounds = array<i64: 4, 1, 16, 16>}]} {
    %c0 = arith.constant 0 : index
    %c0_0 = arith.constant 0 : index
    %c0_1 = arith.constant 0 : index
    %0 = vector.load %arg2[%c0, %c0_0, %c0_1] : memref<1x1x32xf32, #tpu.memory_space<vmem>>, vector<1x1x32xf32>
    %1 = vector.extract_strided_slice %0 {offsets = [0, 0, 0], sizes = [1, 1, 16], strides = [1, 1, 1]} : vector<1x1x32xf32> to vector<1x1x16xf32>
    %2 = vector.shape_cast %1 : vector<1x1x16xf32> to vector<1x16xf32>
    %3 = vector.extract_strided_slice %0 {offsets = [0, 0, 16], sizes = [1, 1, 16], strides = [1, 1, 1]} : vector<1x1x32xf32> to vector<1x1x16xf32>
    %4 = vector.shape_cast %3 : vector<1x1x16xf32> to vector<1x16xf32>
    %c0_2 = arith.constant 0 : index
    %c0_3 = arith.constant 0 : index
    %5 = vector.load %arg1[%c0_2, %c0_3] : memref<16x16xf32, #tpu.memory_space<vmem>>, vector<16x16xf32>
    %6 = vector.shape_cast %5 : vector<16x16xf32> to vector<1x16x16xf32>
    %7 = vector.shape_cast %2 : vector<1x16xf32> to vector<1x16x1xf32>
    %8 = vector.broadcast %7 : vector<1x16x1xf32> to vector<1x16x16xf32>
    %9 = arith.mulf %6, %8 : vector<1x16x16xf32>
    %10 = vector.shape_cast %4 : vector<1x16xf32> to vector<1x1x16xf32>
    %11 = vector.broadcast %10 : vector<1x1x16xf32> to vector<1x16x16xf32>
    %12 = arith.mulf %9, %11 : vector<1x16x16xf32>
    %cst = arith.constant 5.000000e-01 : f32
    %13 = vector.broadcast %cst : f32 to vector<1x16x16xf32>
    %14 = arith.cmpf ogt, %12, %13 : vector<1x16x16xf32>
    %cst_4 = arith.constant dense<0xFF800000> : vector<1x16xf32>
    %15 = vector.multi_reduction <maximumf>, %12, %cst_4 [2] : vector<1x16x16xf32> to vector<1x16xf32>
    %16 = vector.shape_cast %15 : vector<1x16xf32> to vector<1x16x1xf32>
    %cst_5 = arith.constant 5.000000e-01 : f32
    %17 = vector.broadcast %cst_5 : f32 to vector<1x16x1xf32>
    %18 = arith.cmpf ogt, %16, %17 : vector<1x16x1xf32>
    %c0_6 = arith.constant 0 : index
    %c0_7 = arith.constant 0 : index
    %c0_8 = arith.constant 0 : index
    %19 = vector.load %arg3[%c0_6, %c0_7, %c0_8] : memref<1x16x32xbf16, #tpu.memory_space<vmem>>, vector<1x16x8xbf16>
    %c0_9 = arith.constant 0 : index
    %c0_10 = arith.constant 0 : index
    %c0_11 = arith.constant 0 : index
    %20 = vector.load %arg4[%c0_9, %c0_10, %c0_11] : memref<1x16x32xbf16, #tpu.memory_space<vmem>>, vector<1x16x8xbf16>
    %cst_12 = arith.constant dense<0.000000e+00> : vector<1x16x16xf32>
    %21 = tpu.matmul %19, %20, %cst_12 {dimension_numbers = #tpu.dot_dimension_numbers<[2], [2], [1], [1], [0, 0, 0, 1, 1, 1], [0], [0]>} : vector<1x16x8xbf16>, vector<1x16x8xbf16>, vector<1x16x16xf32> -> vector<1x16x16xf32>
    %cst_13 = arith.constant 0.353553385 : f32
    %22 = vector.broadcast %cst_13 : f32 to vector<1x16x16xf32>
    %23 = arith.mulf %21, %22 : vector<1x16x16xf32>
    %cst_14 = arith.constant -1.000000e+30 : f32
    %24 = vector.broadcast %cst_14 : f32 to vector<1x16x16xf32>
    %25 = arith.select %14, %23, %24 : vector<1x16x16xi1>, vector<1x16x16xf32>
    %cst_15 = arith.constant dense<0xFF800000> : vector<1x16xf32>
    %26 = vector.multi_reduction <maximumf>, %25, %cst_15 [2] : vector<1x16x16xf32> to vector<1x16xf32>
    %27 = vector.shape_cast %26 : vector<1x16xf32> to vector<1x16x1xf32>
    %28 = vector.broadcast %27 : vector<1x16x1xf32> to vector<1x16x16xf32>
    %29 = arith.subf %25, %28 : vector<1x16x16xf32>
    %30 = math.exp %29 : vector<1x16x16xf32>
    %cst_16 = arith.constant dense<0.000000e+00> : vector<1x16xf32>
    %31 = vector.multi_reduction <add>, %30, %cst_16 [2] : vector<1x16x16xf32> to vector<1x16xf32>
    %32 = vector.shape_cast %31 : vector<1x16xf32> to vector<1x16x1xf32>
    %33 = tpu.reciprocal %32 {approx = true} : vector<1x16x1xf32> -> vector<1x16x1xf32>
    %cst_17 = arith.constant 0.000000e+00 : f32
    %34 = vector.broadcast %cst_17 : f32 to vector<1x16x1xf32>
    %35 = arith.select %18, %33, %34 : vector<1x16x1xi1>, vector<1x16x1xf32>
    %36 = vector.broadcast %35 : vector<1x16x1xf32> to vector<1x16x16xf32>
    %37 = arith.mulf %30, %36 : vector<1x16x16xf32>
    %c0_18 = arith.constant 0 : index
    %c0_19 = arith.constant 0 : index
    %c0_20 = arith.constant 0 : index
    %c0_21 = arith.constant 0 : index
    %38 = vector.load %arg5[%c0_18, %c0_19, %c0_20, %c0_21] : memref<4x1x16x16xf32, #tpu.memory_space<vmem>>, vector<1x1x16x16xf32>
    %39 = vector.shape_cast %38 : vector<1x1x16x16xf32> to vector<1x16x16xf32>
    %40 = vector.shape_cast %37 : vector<1x16x16xf32> to vector<1x1x16x16xf32>
    tpu.vector_store %arg5[%c0_18, %c0_19, %c0_20, %c0_21], %40 {strides = array<i32>} : memref<4x1x16x16xf32, #tpu.memory_space<vmem>>, vector<1x1x16x16xf32>,
    %c0_22 = arith.constant 0 : index
    %c0_23 = arith.constant 0 : index
    %c8 = arith.constant 8 : index
    %41 = vector.load %arg3[%c0_22, %c0_23, %c8] : memref<1x16x32xbf16, #tpu.memory_space<vmem>>, vector<1x16x8xbf16>
    %c0_24 = arith.constant 0 : index
    %c0_25 = arith.constant 0 : index
    %c8_26 = arith.constant 8 : index
    %42 = vector.load %arg4[%c0_24, %c0_25, %c8_26] : memref<1x16x32xbf16, #tpu.memory_space<vmem>>, vector<1x16x8xbf16>
    %cst_27 = arith.constant dense<0.000000e+00> : vector<1x16x16xf32>
    %43 = tpu.matmul %41, %42, %cst_27 {dimension_numbers = #tpu.dot_dimension_numbers<[2], [2], [1], [1], [0, 0, 0, 1, 1, 1], [0], [0]>} : vector<1x16x8xbf16>, vector<1x16x8xbf16>, vector<1x16x16xf32> -> vector<1x16x16xf32>
    %cst_28 = arith.constant 0.353553385 : f32
    %44 = vector.broadcast %cst_28 : f32 to vector<1x16x16xf32>
    %45 = arith.mulf %43, %44 : vector<1x16x16xf32>
    %cst_29 = arith.constant -1.000000e+30 : f32
    %46 = vector.broadcast %cst_29 : f32 to vector<1x16x16xf32>
    %47 = arith.select %14, %45, %46 : vector<1x16x16xi1>, vector<1x16x16xf32>
    %cst_30 = arith.constant dense<0xFF800000> : vector<1x16xf32>
    %48 = vector.multi_reduction <maximumf>, %47, %cst_30 [2] : vector<1x16x16xf32> to vector<1x16xf32>
    %49 = vector.shape_cast %48 : vector<1x16xf32> to vector<1x16x1xf32>
    %50 = vector.broadcast %49 : vector<1x16x1xf32> to vector<1x16x16xf32>
    %51 = arith.subf %47, %50 : vector<1x16x16xf32>
    %52 = math.exp %51 : vector<1x16x16xf32>
    %cst_31 = arith.constant dense<0.000000e+00> : vector<1x16xf32>
    %53 = vector.multi_reduction <add>, %52, %cst_31 [2] : vector<1x16x16xf32> to vector<1x16xf32>
    %54 = vector.shape_cast %53 : vector<1x16xf32> to vector<1x16x1xf32>
    %55 = tpu.reciprocal %54 {approx = true} : vector<1x16x1xf32> -> vector<1x16x1xf32>
    %cst_32 = arith.constant 0.000000e+00 : f32
    %56 = vector.broadcast %cst_32 : f32 to vector<1x16x1xf32>
    %57 = arith.select %18, %55, %56 : vector<1x16x1xi1>, vector<1x16x1xf32>
    %58 = vector.broadcast %57 : vector<1x16x1xf32> to vector<1x16x16xf32>
    %59 = arith.mulf %52, %58 : vector<1x16x16xf32>
    %c1 = arith.constant 1 : index
    %c0_33 = arith.constant 0 : index
    %c0_34 = arith.constant 0 : index
    %c0_35 = arith.constant 0 : index
    %60 = vector.load %arg5[%c1, %c0_33, %c0_34, %c0_35] : memref<4x1x16x16xf32, #tpu.memory_space<vmem>>, vector<1x1x16x16xf32>
    %61 = vector.shape_cast %60 : vector<1x1x16x16xf32> to vector<1x16x16xf32>
    %62 = vector.shape_cast %59 : vector<1x16x16xf32> to vector<1x1x16x16xf32>
    tpu.vector_store %arg5[%c1, %c0_33, %c0_34, %c0_35], %62 {strides = array<i32>} : memref<4x1x16x16xf32, #tpu.memory_space<vmem>>, vector<1x1x16x16xf32>,
    %c0_36 = arith.constant 0 : index
    %c0_37 = arith.constant 0 : index
    %c16 = arith.constant 16 : index
    %63 = vector.load %arg3[%c0_36, %c0_37, %c16] : memref<1x16x32xbf16, #tpu.memory_space<vmem>>, vector<1x16x8xbf16>
    %c0_38 = arith.constant 0 : index
    %c0_39 = arith.constant 0 : index
    %c16_40 = arith.constant 16 : index
    %64 = vector.load %arg4[%c0_38, %c0_39, %c16_40] : memref<1x16x32xbf16, #tpu.memory_space<vmem>>, vector<1x16x8xbf16>
    %cst_41 = arith.constant dense<0.000000e+00> : vector<1x16x16xf32>
    %65 = tpu.matmul %63, %64, %cst_41 {dimension_numbers = #tpu.dot_dimension_numbers<[2], [2], [1], [1], [0, 0, 0, 1, 1, 1], [0], [0]>} : vector<1x16x8xbf16>, vector<1x16x8xbf16>, vector<1x16x16xf32> -> vector<1x16x16xf32>
    %cst_42 = arith.constant 0.353553385 : f32
    %66 = vector.broadcast %cst_42 : f32 to vector<1x16x16xf32>
    %67 = arith.mulf %65, %66 : vector<1x16x16xf32>
    %cst_43 = arith.constant -1.000000e+30 : f32
    %68 = vector.broadcast %cst_43 : f32 to vector<1x16x16xf32>
    %69 = arith.select %14, %67, %68 : vector<1x16x16xi1>, vector<1x16x16xf32>
    %cst_44 = arith.constant dense<0xFF800000> : vector<1x16xf32>
    %70 = vector.multi_reduction <maximumf>, %69, %cst_44 [2] : vector<1x16x16xf32> to vector<1x16xf32>
    %71 = vector.shape_cast %70 : vector<1x16xf32> to vector<1x16x1xf32>
    %72 = vector.broadcast %71 : vector<1x16x1xf32> to vector<1x16x16xf32>
    %73 = arith.subf %69, %72 : vector<1x16x16xf32>
    %74 = math.exp %73 : vector<1x16x16xf32>
    %cst_45 = arith.constant dense<0.000000e+00> : vector<1x16xf32>
    %75 = vector.multi_reduction <add>, %74, %cst_45 [2] : vector<1x16x16xf32> to vector<1x16xf32>
    %76 = vector.shape_cast %75 : vector<1x16xf32> to vector<1x16x1xf32>
    %77 = tpu.reciprocal %76 {approx = true} : vector<1x16x1xf32> -> vector<1x16x1xf32>
    %cst_46 = arith.constant 0.000000e+00 : f32
    %78 = vector.broadcast %cst_46 : f32 to vector<1x16x1xf32>
    %79 = arith.select %18, %77, %78 : vector<1x16x1xi1>, vector<1x16x1xf32>
    %80 = vector.broadcast %79 : vector<1x16x1xf32> to vector<1x16x16xf32>
    %81 = arith.mulf %74, %80 : vector<1x16x16xf32>
    %c2 = arith.constant 2 : index
    %c0_47 = arith.constant 0 : index
    %c0_48 = arith.constant 0 : index
    %c0_49 = arith.constant 0 : index
    %82 = vector.load %arg5[%c2, %c0_47, %c0_48, %c0_49] : memref<4x1x16x16xf32, #tpu.memory_space<vmem>>, vector<1x1x16x16xf32>
    %83 = vector.shape_cast %82 : vector<1x1x16x16xf32> to vector<1x16x16xf32>
    %84 = vector.shape_cast %81 : vector<1x16x16xf32> to vector<1x1x16x16xf32>
    tpu.vector_store %arg5[%c2, %c0_47, %c0_48, %c0_49], %84 {strides = array<i32>} : memref<4x1x16x16xf32, #tpu.memory_space<vmem>>, vector<1x1x16x16xf32>,
    %c0_50 = arith.constant 0 : index
    %c0_51 = arith.constant 0 : index
    %c24 = arith.constant 24 : index
    %85 = vector.load %arg3[%c0_50, %c0_51, %c24] : memref<1x16x32xbf16, #tpu.memory_space<vmem>>, vector<1x16x8xbf16>
    %c0_52 = arith.constant 0 : index
    %c0_53 = arith.constant 0 : index
    %c24_54 = arith.constant 24 : index
    %86 = vector.load %arg4[%c0_52, %c0_53, %c24_54] : memref<1x16x32xbf16, #tpu.memory_space<vmem>>, vector<1x16x8xbf16>
    %cst_55 = arith.constant dense<0.000000e+00> : vector<1x16x16xf32>
    %87 = tpu.matmul %85, %86, %cst_55 {dimension_numbers = #tpu.dot_dimension_numbers<[2], [2], [1], [1], [0, 0, 0, 1, 1, 1], [0], [0]>} : vector<1x16x8xbf16>, vector<1x16x8xbf16>, vector<1x16x16xf32> -> vector<1x16x16xf32>
    %cst_56 = arith.constant 0.353553385 : f32
    %88 = vector.broadcast %cst_56 : f32 to vector<1x16x16xf32>
    %89 = arith.mulf %87, %88 : vector<1x16x16xf32>
    %cst_57 = arith.constant -1.000000e+30 : f32
    %90 = vector.broadcast %cst_57 : f32 to vector<1x16x16xf32>
    %91 = arith.select %14, %89, %90 : vector<1x16x16xi1>, vector<1x16x16xf32>
    %cst_58 = arith.constant dense<0xFF800000> : vector<1x16xf32>
    %92 = vector.multi_reduction <maximumf>, %91, %cst_58 [2] : vector<1x16x16xf32> to vector<1x16xf32>
    %93 = vector.shape_cast %92 : vector<1x16xf32> to vector<1x16x1xf32>
    %94 = vector.broadcast %93 : vector<1x16x1xf32> to vector<1x16x16xf32>
    %95 = arith.subf %91, %94 : vector<1x16x16xf32>
    %96 = math.exp %95 : vector<1x16x16xf32>
    %cst_59 = arith.constant dense<0.000000e+00> : vector<1x16xf32>
    %97 = vector.multi_reduction <add>, %96, %cst_59 [2] : vector<1x16x16xf32> to vector<1x16xf32>
    %98 = vector.shape_cast %97 : vector<1x16xf32> to vector<1x16x1xf32>
    %99 = tpu.reciprocal %98 {approx = true} : vector<1x16x1xf32> -> vector<1x16x1xf32>
    %cst_60 = arith.constant 0.000000e+00 : f32
    %100 = vector.broadcast %cst_60 : f32 to vector<1x16x1xf32>
    %101 = arith.select %18, %99, %100 : vector<1x16x1xi1>, vector<1x16x1xf32>
    %102 = vector.broadcast %101 : vector<1x16x1xf32> to vector<1x16x16xf32>
    %103 = arith.mulf %96, %102 : vector<1x16x16xf32>
    %c3 = arith.constant 3 : index
    %c0_61 = arith.constant 0 : index
    %c0_62 = arith.constant 0 : index
    %c0_63 = arith.constant 0 : index
    %104 = vector.load %arg5[%c3, %c0_61, %c0_62, %c0_63] : memref<4x1x16x16xf32, #tpu.memory_space<vmem>>, vector<1x1x16x16xf32>
    %105 = vector.shape_cast %104 : vector<1x1x16x16xf32> to vector<1x16x16xf32>
    %106 = vector.shape_cast %103 : vector<1x16x16xf32> to vector<1x1x16x16xf32>
    tpu.vector_store %arg5[%c3, %c0_61, %c0_62, %c0_63], %106 {strides = array<i32>} : memref<4x1x16x16xf32, #tpu.memory_space<vmem>>, vector<1x1x16x16xf32>,
    return
  }
  func.func @transform_0(%arg0: i32) -> (i32, i32) {
    %c0_i32 = arith.constant 0 : i32
    %c0_i32_0 = arith.constant 0 : i32
    %c0_i32_1 = arith.constant 0 : i32
    return %c0_i32, %c0_i32_0 : i32, i32
  }
  func.func @transform_1(%arg0: i32) -> (i32, i32, i32) {
    %c0_i32 = arith.constant 0 : i32
    %c0_i32_0 = arith.constant 0 : i32
    %c0_i32_1 = arith.constant 0 : i32
    return %arg0, %c0_i32, %c0_i32_0 : i32, i32, i32
  }
  func.func @transform_2(%arg0: i32) -> (i32, i32, i32) {
    %c0_i32 = arith.constant 0 : i32
    %c0_i32_0 = arith.constant 0 : i32
    %c0_i32_1 = arith.constant 0 : i32
    return %arg0, %c0_i32, %c0_i32_0 : i32, i32, i32
  }
  func.func @transform_3(%arg0: i32) -> (i32, i32, i32) {
    %c0_i32 = arith.constant 0 : i32
    %c0_i32_0 = arith.constant 0 : i32
    %c0_i32_1 = arith.constant 0 : i32
    return %arg0, %c0_i32, %c0_i32_0 : i32, i32, i32
  }
  func.func @transform_4(%arg0: i32) -> (i32, i32, i32, i32) {
    %c0_i32 = arith.constant 0 : i32
    %c0_i32_0 = arith.constant 0 : i32
    %c0_i32_1 = arith.constant 0 : i32
    %c0_i32_2 = arith.constant 0 : i32
    return %c0_i32, %arg0, %c0_i32_0, %c0_i32_1 : i32, i32, i32, i32
  }
}

</mosaic_0001>

<llo_original>
// kernel: tpu_custom_call.1
$region0: #{tpu_custom_call.1}
  #allocation0 [shape = 'u32[]', space=smem, size = 0x4, offset = 0x4, fixed_abs, tag = 'smem constant byte address 0x4 - core index']
  #allocation1 [shape = 'u32[144,128]{1,0:T(1,128)}', space=vmem, size = 0x12000, scoped, tag = 'internal scratch']
  #allocation9 [shape = 's32[]', space=sflag, size = 0x4, offset = 0, fixed_abs, tag = 'sflag constant byte address 0x0 - dummy sync flag']
  %s0 = inlined_call_operand.hbm [shape: f32[16,16], index: 0, kind: input, shape index: {}]
  %s1 = inlined_call_operand.vmem [shape: f32[2,1,32], index: 1, kind: input, shape index: {}]
  %s2 = inlined_call_operand.hbm [shape: bf16[2,16,32], index: 2, kind: input, shape index: {}]
  %s3 = inlined_call_operand.hbm [shape: bf16[2,16,32], index: 3, kind: input, shape index: {}]
  %s4 = inlined_call_operand.hbm [shape: f32[4,2,16,16], index: 4, kind: output, shape index: {}]
  %s5 = sld [smem:[#allocation0]]
  $region61: #{tpu_custom_call.1} parent=0
    _
  %s7 = ssub.s32 1, %s5
  %s8 = scalar_select 0, %s7, %s5
  $region1: #{tpu_custom_call.1} parent=0
    #allocation2 [shape = 'u8[8192]{0}', space=vmem, size = 0x2000, scoped, tag = 'input window, operand 0, single buffered']
    #allocation3 [shape = 's32[2]{0}', space=sflag, size = 0x8, scoped, tag = 'scoped memory for tpu_custom_call.1']
    #allocation4 [shape = 's32[2]{0}', space=sflag, size = 0x8, scoped, tag = 'scoped memory for tpu_custom_call.1']
    #allocation5 [shape = 'u8[8192]{0}', space=vmem, size = 0x2000, scoped, tag = 'input window, operand 2']
    #allocation6 [shape = 's32[2]{0}', space=sflag, size = 0x8, scoped, tag = 'scoped memory for tpu_custom_call.1']
    #allocation7 [shape = 'u8[8192]{0}', space=vmem, size = 0x2000, scoped, tag = 'input window, operand 3']
    #allocation8 [shape = 'u8[65536]{0}', space=vmem, size = 0x10000, scoped, tag = 'output window, operand 0']
    %9 = vsyncpa [#allocation3], 0
    %10 = vsyncpa [#allocation6], 0
    %s11 = scalar_lea.sflag [#allocation6], 1
    %12 = vsyncpa %s11, 0
    %13 = vsyncpa [#allocation4], 0
    %s14 = scalar_lea.sflag [#allocation4], 1
    %15 = vsyncpa %s14, 0
    loop: start=0, step=1, limit=4
    $region2: #{tpu_custom_call.1} parent=1 // loop_pre_header
      _
    $region3: #{tpu_custom_call.1} parent=1 // loop_header
      %s17 = sphi 0, %s21
      %p18 = scmp.ge.s32.totalorder %s17, 4
      %s25 = sphi 0, %s25
      %s27 = sphi 0, %s25
      %s28 = sphi 0, %s27
      %s42 = sphi 0, %s28
      %s48 = sphi 0, %s50
      %s51 = sphi 0, %s48
      %s52 = sphi 0, %s51
      %s68 = sphi 0, %s52
      %s74 = sphi 0, %s76
      %s77 = sphi 0, %s74
      %s78 = sphi 0, %s77
      %s94 = sphi 0, %s78
      %s100 = sphi 0, %s102
      %s103 = sphi 0, %s100
      %s104 = sphi 0, %s103
      %s120 = sphi 0, %s104
      %s126 = sphi 0, %s128
      %s129 = sphi 0, %s126
      %s130 = sphi 0, %s129
      %s146 = sphi 0, %s130
    $region4: #{tpu_custom_call.1} parent=1 // loop_header_branch
      %20 = sbr.rel (%p18) target = $region8
    $region5: #{tpu_custom_call.1} parent=1 // loop_body
      %s22 = ssub.s32 %s17, 1
      %s23 = ssub.s32 %s17, 2
      %s24 = sadd.s32 %s17, 1
      %s26 = sadd.s32 %s25, 1
      %p29 = scmp.eq.s32.totalorder %s17, 1
      %p30 = scmp.ne.s32.totalorder %s25, %s27
      %p31 = scmp.eq.s32.totalorder %s17, 0
      %p32 = por %p30, %p31
      %p33 = scmp.ne.s32.totalorder %s25, %s27
      %p34 = scmp.eq.s32.totalorder %s22, 1
      %p35 = por %p33, %p34
      %p36 = scmp.ne.s32.totalorder %s27, %s28
      %p37 = scmp.eq.s32.totalorder %s22, 0
      %p38 = por %p36, %p37
      %p39 = scmp.ne.s32.totalorder %s27, %s28
      %p40 = scmp.eq.s32.totalorder %s23, 1
      %p41 = por %p39, %p40
      %p43 = scmp.ne.s32.totalorder %s28, %s42
      %p44 = scmp.eq.s32.totalorder %s23, 0
      %p45 = por %p43, %p44
      %s46 = ssub.s32 %s17, %s24
      %p47 = scmp.eq.s32.totalorder %s46, 0
      %s49 = sadd.s32 %s48, 1
      %s50 = scalar_select %p47, %s48, %s49
      %p53 = pneg %p47
      %p54 = scmp.eq.s32.totalorder %s17, 1
      %p55 = por %p53, %p54
      %p56 = scmp.ne.s32.totalorder %s48, %s51
      %p57 = scmp.eq.s32.totalorder %s17, 0
      %p58 = por %p56, %p57
      %p59 = scmp.ne.s32.totalorder %s48, %s51
      %p60 = scmp.eq.s32.totalorder %s22, 1
      %p61 = por %p59, %p60
      %p62 = scmp.ne.s32.totalorder %s51, %s52
      %p63 = scmp.eq.s32.totalorder %s22, 0
      %p64 = por %p62, %p63
      %p65 = scmp.ne.s32.totalorder %s51, %s52
      %p66 = scmp.eq.s32.totalorder %s23, 1
      %p67 = por %p65, %p66
      %p69 = scmp.ne.s32.totalorder %s52, %s68
      %p70 = scmp.eq.s32.totalorder %s23, 0
      %p71 = por %p69, %p70
      %s72 = ssub.s32 %s17, %s24
      %p73 = scmp.eq.s32.totalorder %s72, 0
      %s75 = sadd.s32 %s74, 1
      %s76 = scalar_select %p73, %s74, %s75
      %p79 = pneg %p73
      %p80 = scmp.eq.s32.totalorder %s17, 1
      %p81 = por %p79, %p80
      %p82 = scmp.ne.s32.totalorder %s74, %s77
      %p83 = scmp.eq.s32.totalorder %s17, 0
      %p84 = por %p82, %p83
      %p85 = scmp.ne.s32.totalorder %s74, %s77
      %p86 = scmp.eq.s32.totalorder %s22, 1
      %p87 = por %p85, %p86
      %p88 = scmp.ne.s32.totalorder %s77, %s78
      %p89 = scmp.eq.s32.totalorder %s22, 0
      %p90 = por %p88, %p89
      %p91 = scmp.ne.s32.totalorder %s77, %s78
      %p92 = scmp.eq.s32.totalorder %s23, 1
      %p93 = por %p91, %p92
      %p95 = scmp.ne.s32.totalorder %s78, %s94
      %p96 = scmp.eq.s32.totalorder %s23, 0
      %p97 = por %p95, %p96
      %s98 = ssub.s32 %s17, %s24
      %p99 = scmp.eq.s32.totalorder %s98, 0
      %s101 = sadd.s32 %s100, 1
      %s102 = scalar_select %p99, %s100, %s101
      %p105 = pneg %p99
      %p106 = scmp.eq.s32.totalorder %s17, 1
      %p107 = por %p105, %p106
      %p108 = scmp.ne.s32.totalorder %s100, %s103
      %p109 = scmp.eq.s32.totalorder %s17, 0
      %p110 = por %p108, %p109
      %p111 = scmp.ne.s32.totalorder %s100, %s103
      %p112 = scmp.eq.s32.totalorder %s22, 1
      %p113 = por %p111, %p112
      %p114 = scmp.ne.s32.totalorder %s103, %s104
      %p115 = scmp.eq.s32.totalorder %s22, 0
      %p116 = por %p114, %p115
      %p117 = scmp.ne.s32.totalorder %s103, %s104
      %p118 = scmp.eq.s32.totalorder %s23, 1
      %p119 = por %p117, %p118
      %p121 = scmp.ne.s32.totalorder %s104, %s120
      %p122 = scmp.eq.s32.totalorder %s23, 0
      %p123 = por %p121, %p122
      %s124 = ssub.s32 %s17, %s24
      %p125 = scmp.eq.s32.totalorder %s124, 0
      %s127 = sadd.s32 %s126, 1
      %s128 = scalar_select %p125, %s126, %s127
      %p131 = pneg %p125
      %p132 = scmp.eq.s32.totalorder %s17, 1
      %p133 = por %p131, %p132
      %p134 = scmp.ne.s32.totalorder %s126, %s129
      %p135 = scmp.eq.s32.totalorder %s17, 0
      %p136 = por %p134, %p135
      %p137 = scmp.ne.s32.totalorder %s126, %s129
      %p138 = scmp.eq.s32.totalorder %s22, 1
      %p139 = por %p137, %p138
      %p140 = scmp.ne.s32.totalorder %s129, %s130
      %p141 = scmp.eq.s32.totalorder %s22, 0
      %p142 = por %p140, %p141
      %p143 = scmp.ne.s32.totalorder %s129, %s130
      %p144 = scmp.eq.s32.totalorder %s23, 1
      %p145 = por %p143, %p144
      %p147 = scmp.ne.s32.totalorder %s130, %s146
      %p148 = scmp.eq.s32.totalorder %s23, 0
      %p149 = por %p147, %p148
      %p150 = scmp.le.s32.totalorder 1, %s17
      %p151 = scmp.lt.s32.totalorder %s17, 3
      %p152 = pnand %p150, %p151
      %p153 = pneg %p152
      // Predicated region
      $region9: #{tpu_custom_call.1} parent=5 // pred_check
        _
      $region10: #{tpu_custom_call.1} parent=5 // pred_check_branch
        %155 = sbr.rel (%p152) target = $region12
      $region11: #{tpu_custom_call.1} parent=5 // pred_region
        %s156 = ssub.s32 %s17, 1
        // Predicated region
        $region13: #{tpu_custom_call.1} parent=11 // pred_check
          %p157 = pneg %p38
        $region14: #{tpu_custom_call.1} parent=11 // pred_check_branch
          %159 = sbr.rel (%p157) target = $region16
        $region15: #{tpu_custom_call.1} parent=11 // pred_region
          %s161 = ssub.s32 256, 256
          %162 = vsyncadd [#allocation3], %s161
          %s163 = sshll.u32 [#allocation2], 4
          %s164 = int_to_ptr.vmem [resolvable:$true] %s163
          %169 = dma.hbm_to_vmem [thread:$0]  %s0, 256, %s164, [#allocation3], 128, 128, 8
        $region16: #{tpu_custom_call.1} parent=11 // pred_fallthru
          _
      $region12: #{tpu_custom_call.1} parent=5 // pred_fallthru
        _
      %p170 = scmp.lt.s32.totalorder %s17, 2
      // Predicated region
      $region17: #{tpu_custom_call.1} parent=5 // pred_check
        %p171 = pneg %p170
      $region18: #{tpu_custom_call.1} parent=5 // pred_check_branch
        %173 = sbr.rel (%p171) target = $region20
      $region19: #{tpu_custom_call.1} parent=5 // pred_region
        // Predicated region
        $region21: #{tpu_custom_call.1} parent=19 // pred_check
          %p174 = pneg %p58
        $region22: #{tpu_custom_call.1} parent=19 // pred_check_branch
          %176 = sbr.rel (%p174) target = $region24
        $region23: #{tpu_custom_call.1} parent=19 // pred_region
          %p177 = scmp.lt.s32.totalorder %s17, 1
          %s178 = scalar_select %p177, %s17, 1
          %s179 = scalar_lea.vmem %s1, %s178
        $region24: #{tpu_custom_call.1} parent=19 // pred_fallthru
          _
        // Predicated region
        $region25: #{tpu_custom_call.1} parent=19 // pred_check
          %p180 = pneg %p84
        $region26: #{tpu_custom_call.1} parent=19 // pred_check_branch
          %182 = sbr.rel (%p180) target = $region28
        $region27: #{tpu_custom_call.1} parent=19 // pred_region
          %s183 = sand.u32 %s17, 1
          %s184 = scalar_lea.sflag [#allocation6], %s183
          %s185 = sand.u32 %s74, 1
          %s186 = smul.addr %s185, 8
          %s187 = scalar_lea.vmem [#allocation5], %s186
          %s189 = ssub.s32 128, 128
          %190 = vsyncadd %s184, %s189
          %s191 = smul.addr %s17, 2
          %s192 = smul.addr %s191, 64
          %s193 = scalar_lea.hbm %s2, %s192
          %s194 = sshll.u32 %s187, 4
          %s195 = int_to_ptr.vmem [resolvable:$true] %s194
          %200 = dma.hbm_to_vmem [thread:$0]  %s193, 128, %s195, %s184, 64, 64, 4
        $region28: #{tpu_custom_call.1} parent=19 // pred_fallthru
          _
        // Predicated region
        $region29: #{tpu_custom_call.1} parent=19 // pred_check
          %p201 = pneg %p110
        $region30: #{tpu_custom_call.1} parent=19 // pred_check_branch
          %203 = sbr.rel (%p201) target = $region32
        $region31: #{tpu_custom_call.1} parent=19 // pred_region
          %s204 = sand.u32 %s17, 1
          %s205 = scalar_lea.sflag [#allocation6], %s204
          %s206 = sand.u32 %s100, 1
          %s207 = smul.addr %s206, 8
          %s208 = scalar_lea.vmem [#allocation7], %s207
          %s210 = ssub.s32 128, 128
          %211 = vsyncadd %s205, %s210
          %s212 = smul.addr %s17, 2
          %s213 = smul.addr %s212, 64
          %s214 = scalar_lea.hbm %s3, %s213
          %s215 = sshll.u32 %s208, 4
          %s216 = int_to_ptr.vmem [resolvable:$true] %s215
          %221 = dma.hbm_to_vmem [thread:$0]  %s214, 128, %s216, %s205, 64, 64, 4
        $region32: #{tpu_custom_call.1} parent=19 // pred_fallthru
          _
      $region20: #{tpu_custom_call.1} parent=5 // pred_fallthru
        _
      %p222 = scmp.le.s32.totalorder 1, %s17
      %p223 = scmp.lt.s32.totalorder %s17, 3
      %p224 = pnand %p222, %p223
      %p225 = pneg %p224
      // Predicated region
      $region33: #{tpu_custom_call.1} parent=5 // pred_check
        _
      $region34: #{tpu_custom_call.1} parent=5 // pred_check_branch
        %227 = sbr.rel (%p224) target = $region36
      $region35: #{tpu_custom_call.1} parent=5 // pred_region
        %s228 = ssub.s32 %s17, 1
        // Predicated region
        $region37: #{tpu_custom_call.1} parent=35 // pred_check
          %p229 = pneg %p38
        $region38: #{tpu_custom_call.1} parent=35 // pred_check_branch
          %231 = sbr.rel (%p229) target = $region40
        $region39: #{tpu_custom_call.1} parent=35 // pred_region
          %232 = dma.done [#allocation3], 256
        $region40: #{tpu_custom_call.1} parent=35 // pred_fallthru
          _
        %s233 = sand.u32 %s22, 1
        %s234 = scalar_lea.sflag [#allocation6], %s233
        %s235 = sand.u32 %s77, 1
        %s236 = smul.addr %s235, 8
        %s237 = scalar_lea.vmem [#allocation5], %s236
        // Predicated region
        $region41: #{tpu_custom_call.1} parent=35 // pred_check
          %p238 = pneg %p90
        $region42: #{tpu_custom_call.1} parent=35 // pred_check_branch
          %240 = sbr.rel (%p238) target = $region44
        $region43: #{tpu_custom_call.1} parent=35 // pred_region
          %241 = dma.done %s234, 128
        $region44: #{tpu_custom_call.1} parent=35 // pred_fallthru
          _
        %s242 = sand.u32 %s22, 1
        %s243 = scalar_lea.sflag [#allocation6], %s242
        %s244 = sand.u32 %s103, 1
        %s245 = smul.addr %s244, 8
        %s246 = scalar_lea.vmem [#allocation7], %s245
        // Predicated region
        $region45: #{tpu_custom_call.1} parent=35 // pred_check
          %p247 = pneg %p116
        $region46: #{tpu_custom_call.1} parent=35 // pred_check_branch
          %249 = sbr.rel (%p247) target = $region48
        $region47: #{tpu_custom_call.1} parent=35 // pred_region
          %250 = dma.done %s243, 128
        $region48: #{tpu_custom_call.1} parent=35 // pred_fallthru
          _
        %p251 = pneg %p38
        %p252 = pneg %p35
        %p253 = scmp.lt.s32.totalorder %s22, 1
        %s254 = scalar_select %p253, %s22, 1
        %s255 = scalar_lea.vmem %s1, %s254
        %p256 = pneg %p64
        %p257 = pneg %p61
        %s258 = sand.u32 %s22, 1
        %s259 = scalar_lea.sflag [#allocation6], %s258
        %s260 = sand.u32 %s77, 1
        %s261 = smul.addr %s260, 8
        %s262 = scalar_lea.vmem [#allocation5], %s261
        %p263 = pneg %p90
        %p264 = pneg %p87
        %s265 = sand.u32 %s22, 1
        %s266 = scalar_lea.sflag [#allocation6], %s265
        %s267 = sand.u32 %s103, 1
        %s268 = smul.addr %s267, 8
        %s269 = scalar_lea.vmem [#allocation7], %s268
        %p270 = pneg %p116
        %p271 = pneg %p113
        %p272 = pneg %p142
        %p273 = pneg %p139
        %s274 = sand.u32 %s129, 1
        %s275 = scalar_lea.sflag [#allocation4], %s274
        %s276 = sand.u32 %s129, 1
        %s277 = smul.addr %s276, 64
        %s278 = scalar_lea.vmem [#allocation8], %s277
        %p279 = scmp.lt.s32.totalorder %s22, 1
        %s280 = scalar_select %p279, %s22, 1
        %s281 = scalar_lea.vmem %s1, %s280
        %v283 = vld [vmem:[%s281] sm:$0x1]
        %v284 = vld [vmem:[#allocation2] sm:$0xff]
        %v285 = vld [vmem:[#allocation2 + $0x8] sm:$0xff]
        %v286 = vlaneseq
        %v287 = vshrl.u32 %v286, 7
        %v288 = vsub.s32 0, %v287
        %v289 = vrot.slane %v283, %v288
        %291 = vbcast.lane.b32.xlu0 %v289, 256
        %v292 = vpop.permute.xlu0 %291
        %s294 = sor.u32 256, 8
        %295 = vbcast.lane.b32.xlu0 %v289, %s294
        %v296 = vpop.permute.xlu0 %295
        %v297 = vmul.f32 %v284, %v292
        %v298 = vmul.f32 %v285, %v296
        %v300 = vlaneseq
        %v301 = vshrl.u32 %v300, 7
        %v302 = vsub.s32 0, %v301
        %v303 = vrot.slane %v283, %v302
        %304 = vrot.lane.b32.xlu0 %v303, 112
        %v305 = vpop.permute.xlu0 %304
        %v307 = vmul.f32 %v297, %v305
        %v308 = vmul.f32 %v298, %v305
        %vm309 = vcmp.gt.f32.partialorder %v307, 0.5
        %vm310 = vcmp.gt.f32.partialorder %v308, 0.5
        %vm311 = vcmask 130048
        %v312 = vsel %vm311, %v307, -inf
        %313 = vmax.xlane.f32.xlu0 %v312
        %v314 = vpop.xlane.xlu0 %313
        %v315 = vsel %vm311, %v308, -inf
        %316 = vmax.xlane.f32.xlu0 %v315
        %v317 = vpop.xlane.xlu0 %316
        %vm318 = vcmp.gt.f32.partialorder %v314, 0.5
        %vm319 = vcmp.gt.f32.partialorder %v317, 0.5
        %v320 = vld [vmem:[%s237] sm:$0xf]
        %v321 = vld [vmem:[%s237 + $0x4] sm:$0xf]
        %v322 = vld [vmem:[%s246] sm:$0xf]
        %v323 = vld [vmem:[%s246 + $0x4] sm:$0xf]
        %v326 = vunpack.c.l.b16 %v320
        %v327 = vunpack.c.l.b16 %v321
        %v328 = vpack.c.b16 %v327, %v326
        %v331 = vunpack.c.l.b16 %v322
        %v332 = vunpack.c.l.b16 %v323
        %v333 = vpack.c.b16 %v332, %v331
        %vm334 = vcmask 64512
        %v336 = vsel %vm334, %v328, 0
        %v339 = vsel %vm334, %v333, 0
        %341 = vmatprep.subr.bf16.mxu0 0
        %342 = vmatpush1.bf16.xpose.msra.mxu0 %v339
        %343 = vmatprep.subr.bf16.mxu0 0
        %344 = vmatpush1.bf16.xpose.msra.mxu0 0
        %345 = vmatprep.subr.bf16.mxu0 0
        %346 = vmatpush1.bf16.xpose.msra.mxu0 0
        %347 = vmatprep.subr.bf16.mxu0 0
        %348 = vmatpush1.bf16.xpose.msra.mxu0 0
        %349 = vmatprep.subr.bf16.mxu0 0
        %350 = vmatpush1.bf16.xpose.msra.mxu0 0
        %351 = vmatprep.subr.bf16.mxu0 0
        %352 = vmatpush1.bf16.xpose.msra.mxu0 0
        %353 = vmatprep.subr.bf16.mxu0 0
        %354 = vmatpush1.bf16.xpose.msra.mxu0 0
        %355 = vmatprep.subr.bf16.mxu0 0
        %356 = vmatpush1.bf16.xpose.msra.mxu0 0
        %357 = vmatprep.subr.bf16.mxu0 0
        %358 = vmatpush1.bf16.xpose.msra.mxu0 0
        %359 = vmatprep.subr.bf16.mxu0 0
        %360 = vmatpush1.bf16.xpose.msra.mxu0 0
        %361 = vmatprep.subr.bf16.mxu0 0
        %362 = vmatpush1.bf16.xpose.msra.mxu0 0
        %363 = vmatprep.subr.bf16.mxu0 0
        %364 = vmatpush1.bf16.xpose.msra.mxu0 0
        %365 = vmatprep.subr.bf16.mxu0 0
        %366 = vmatpush1.bf16.xpose.msra.mxu0 0
        %367 = vmatprep.subr.bf16.mxu0 0
        %368 = vmatpush1.bf16.xpose.msra.mxu0 0
        %369 = vmatprep.subr.bf16.mxu0 0
        %370 = vmatpush1.bf16.xpose.msra.mxu0 0
        %371 = vmatprep.subr.bf16.mxu0 0
        %372 = vmatpush1.bf16.xpose.msra.mxu0 0
        %373 = vmatprep.mubr.bf16.mxu0 0
        %374 = vmatmul.mubr.bf16.gmra.mrb[0].mxu0 %v336
        %v375 = vpop.f32.mrb[0].mxu0
        %v376 = vadd.f32 0.0, %v375
        %v377 = vpop.f32.mrb[0].mxu0
        %v378 = vpop.f32.mrb[0].mxu0
        %v379 = vadd.f32 0.0, %v378
        %v380 = vpop.f32.mrb[0].mxu0
        %381 = vdwg.mxu0
        %v382 = vmul.f32 %v376, 0.35355338
        %v383 = vmul.f32 %v379, 0.35355338
        %v384 = vsel %vm309, %v382, -1e+30
        %v385 = vsel %vm310, %v383, -1e+30
        %v386 = vsel %vm311, %v384, -inf
        %387 = vmax.xlane.f32.xlu0 %v386
        %v388 = vpop.xlane.xlu0 %387
        %v389 = vsel %vm311, %v385, -inf
        %390 = vmax.xlane.f32.xlu0 %v389
        %v391 = vpop.xlane.xlu0 %390
        %v392 = vsub.f32 %v384, %v388
        %v393 = vsub.f32 %v385, %v391
        %v394 = vmul.f32 %v392, 1.442695
        %v395 = vpow.pop %v394
        %v396 = vmul.f32 %v393, 1.442695
        %v397 = vpow.pop %v396
        %v398 = vsel %vm311, %v395, 0.0
        %399 = vadd.xlane.f32.xlu0 %v398
        %v400 = vpop.xlane.xlu0 %399
        %v401 = vsel %vm311, %v397, 0.0
        %402 = vadd.xlane.f32.xlu0 %v401
        %v403 = vpop.xlane.xlu0 %402
        %v404 = vrcp.pop %v400
        %v405 = vrcp.pop %v403
        %v406 = vsel %vm318, %v404, 0.0
        %v407 = vsel %vm319, %v405, 0.0
        %v408 = vmul.f32 %v395, %v406
        %v409 = vmul.f32 %v397, %v407
        %410 = vst.msk [vmem:[%s278] sm:$0xff] %vm311, %v408
        %411 = vst.msk [vmem:[%s278 + $0x8] sm:$0xff] %vm311, %v409
        %v412 = vld [vmem:[%s237] sm:$0xf]
        %v413 = vld [vmem:[%s237 + $0x4] sm:$0xf]
        %v414 = vld [vmem:[%s246] sm:$0xf]
        %v415 = vld [vmem:[%s246 + $0x4] sm:$0xf]
        %v418 = vunpack.c.l.b16 %v412
        %v419 = vunpack.c.l.b16 %v413
        %v420 = vpack.c.b16 %v419, %v418
        %421 = vrot.lane.b32.xlu0 %v420, 120
        %v422 = vpop.permute.xlu0 %421
        %v425 = vunpack.c.l.b16 %v414
        %v426 = vunpack.c.l.b16 %v415
        %v427 = vpack.c.b16 %v426, %v425
        %428 = vrot.lane.b32.xlu0 %v427, 120
        %v429 = vpop.permute.xlu0 %428
        %v431 = vsel %vm334, %v422, 0
        %v434 = vsel %vm334, %v429, 0
        %436 = vmatprep.subr.bf16.mxu0 0
        %437 = vmatpush1.bf16.xpose.msra.mxu0 %v434
        %438 = vmatprep.subr.bf16.mxu0 0
        %439 = vmatpush1.bf16.xpose.msra.mxu0 0
        %440 = vmatprep.subr.bf16.mxu0 0
        %441 = vmatpush1.bf16.xpose.msra.mxu0 0
        %442 = vmatprep.subr.bf16.mxu0 0
        %443 = vmatpush1.bf16.xpose.msra.mxu0 0
        %444 = vmatprep.subr.bf16.mxu0 0
        %445 = vmatpush1.bf16.xpose.msra.mxu0 0
        %446 = vmatprep.subr.bf16.mxu0 0
        %447 = vmatpush1.bf16.xpose.msra.mxu0 0
        %448 = vmatprep.subr.bf16.mxu0 0
        %449 = vmatpush1.bf16.xpose.msra.mxu0 0
        %450 = vmatprep.subr.bf16.mxu0 0
        %451 = vmatpush1.bf16.xpose.msra.mxu0 0
        %452 = vmatprep.subr.bf16.mxu0 0
        %453 = vmatpush1.bf16.xpose.msra.mxu0 0
        %454 = vmatprep.subr.bf16.mxu0 0
        %455 = vmatpush1.bf16.xpose.msra.mxu0 0
        %456 = vmatprep.subr.bf16.mxu0 0
        %457 = vmatpush1.bf16.xpose.msra.mxu0 0
        %458 = vmatprep.subr.bf16.mxu0 0
        %459 = vmatpush1.bf16.xpose.msra.mxu0 0
        %460 = vmatprep.subr.bf16.mxu0 0
        %461 = vmatpush1.bf16.xpose.msra.mxu0 0
        %462 = vmatprep.subr.bf16.mxu0 0
        %463 = vmatpush1.bf16.xpose.msra.mxu0 0
        %464 = vmatprep.subr.bf16.mxu0 0
        %465 = vmatpush1.bf16.xpose.msra.mxu0 0
        %466 = vmatprep.subr.bf16.mxu0 0
        %467 = vmatpush1.bf16.xpose.msra.mxu0 0
        %468 = vmatprep.mubr.bf16.mxu0 0
        %469 = vmatmul.mubr.bf16.gmra.mrb[0].mxu0 %v431
        %v470 = vpop.f32.mrb[0].mxu0
        %v471 = vadd.f32 0.0, %v470
        %v472 = vpop.f32.mrb[0].mxu0
        %v473 = vpop.f32.mrb[0].mxu0
        %v474 = vadd.f32 0.0, %v473
        %v475 = vpop.f32.mrb[0].mxu0
        %476 = vdwg.mxu0
        %v477 = vmul.f32 %v471, 0.35355338
        %v478 = vmul.f32 %v474, 0.35355338
        %v479 = vsel %vm309, %v477, -1e+30
        %v480 = vsel %vm310, %v478, -1e+30
        %v481 = vsel %vm311, %v479, -inf
        %482 = vmax.xlane.f32.xlu0 %v481
        %v483 = vpop.xlane.xlu0 %482
        %v484 = vsel %vm311, %v480, -inf
        %485 = vmax.xlane.f32.xlu0 %v484
        %v486 = vpop.xlane.xlu0 %485
        %v487 = vsub.f32 %v479, %v483
        %v488 = vsub.f32 %v480, %v486
        %v489 = vmul.f32 %v487, 1.442695
        %v490 = vpow.pop %v489
        %v491 = vmul.f32 %v488, 1.442695
        %v492 = vpow.pop %v491
        %v493 = vsel %vm311, %v490, 0.0
        %494 = vadd.xlane.f32.xlu0 %v493
        %v495 = vpop.xlane.xlu0 %494
        %v496 = vsel %vm311, %v492, 0.0
        %497 = vadd.xlane.f32.xlu0 %v496
        %v498 = vpop.xlane.xlu0 %497
        %v499 = vrcp.pop %v495
        %v500 = vrcp.pop %v498
        %v501 = vsel %vm318, %v499, 0.0
        %v502 = vsel %vm319, %v500, 0.0
        %v503 = vmul.f32 %v490, %v501
        %v504 = vmul.f32 %v492, %v502
        %s505 = scalar_lea.vmem %s278, 16 [#allocation8]
        %506 = vst.msk [vmem:[%s505] sm:$0xff] %vm311, %v503
        %507 = vst.msk [vmem:[%s505 + $0x8] sm:$0xff] %vm311, %v504
        %v508 = vld [vmem:[%s237] sm:$0xf]
        %v509 = vld [vmem:[%s237 + $0x4] sm:$0xf]
        %v510 = vld [vmem:[%s246] sm:$0xf]
        %v511 = vld [vmem:[%s246 + $0x4] sm:$0xf]
        %v514 = vunpack.c.l.b16 %v508
        %v515 = vunpack.c.l.b16 %v509
        %v516 = vpack.c.b16 %v515, %v514
        %517 = vrot.lane.b32.xlu0 %v516, 112
        %v518 = vpop.permute.xlu0 %517
        %v521 = vunpack.c.l.b16 %v510
        %v522 = vunpack.c.l.b16 %v511
        %v523 = vpack.c.b16 %v522, %v521
        %524 = vrot.lane.b32.xlu0 %v523, 112
        %v525 = vpop.permute.xlu0 %524
        %v527 = vsel %vm334, %v518, 0
        %v530 = vsel %vm334, %v525, 0
        %532 = vmatprep.subr.bf16.mxu0 0
        %533 = vmatpush1.bf16.xpose.msra.mxu0 %v530
        %534 = vmatprep.subr.bf16.mxu0 0
        %535 = vmatpush1.bf16.xpose.msra.mxu0 0
        %536 = vmatprep.subr.bf16.mxu0 0
        %537 = vmatpush1.bf16.xpose.msra.mxu0 0
        %538 = vmatprep.subr.bf16.mxu0 0
        %539 = vmatpush1.bf16.xpose.msra.mxu0 0
        %540 = vmatprep.subr.bf16.mxu0 0
        %541 = vmatpush1.bf16.xpose.msra.mxu0 0
        %542 = vmatprep.subr.bf16.mxu0 0
        %543 = vmatpush1.bf16.xpose.msra.mxu0 0
        %544 = vmatprep.subr.bf16.mxu0 0
        %545 = vmatpush1.bf16.xpose.msra.mxu0 0
        %546 = vmatprep.subr.bf16.mxu0 0
        %547 = vmatpush1.bf16.xpose.msra.mxu0 0
        %548 = vmatprep.subr.bf16.mxu0 0
        %549 = vmatpush1.bf16.xpose.msra.mxu0 0
        %550 = vmatprep.subr.bf16.mxu0 0
        %551 = vmatpush1.bf16.xpose.msra.mxu0 0
        %552 = vmatprep.subr.bf16.mxu0 0
        %553 = vmatpush1.bf16.xpose.msra.mxu0 0
        %554 = vmatprep.subr.bf16.mxu0 0
        %555 = vmatpush1.bf16.xpose.msra.mxu0 0
        %556 = vmatprep.subr.bf16.mxu0 0
        %557 = vmatpush1.bf16.xpose.msra.mxu0 0
        %558 = vmatprep.subr.bf16.mxu0 0
        %559 = vmatpush1.bf16.xpose.msra.mxu0 0
        %560 = vmatprep.subr.bf16.mxu0 0
        %561 = vmatpush1.bf16.xpose.msra.mxu0 0
        %562 = vmatprep.subr.bf16.mxu0 0
        %563 = vmatpush1.bf16.xpose.msra.mxu0 0
        %564 = vmatprep.mubr.bf16.mxu0 0
        %565 = vmatmul.mubr.bf16.gmra.mrb[0].mxu0 %v527
        %v566 = vpop.f32.mrb[0].mxu0
        %v567 = vadd.f32 0.0, %v566
        %v568 = vpop.f32.mrb[0].mxu0
        %v569 = vpop.f32.mrb[0].mxu0
        %v570 = vadd.f32 0.0, %v569
        %v571 = vpop.f32.mrb[0].mxu0
        %572 = vdwg.mxu0
        %v573 = vmul.f32 %v567, 0.35355338
        %v574 = vmul.f32 %v570, 0.35355338
        %v575 = vsel %vm309, %v573, -1e+30
        %v576 = vsel %vm310, %v574, -1e+30
        %v577 = vsel %vm311, %v575, -inf
        %578 = vmax.xlane.f32.xlu0 %v577
        %v579 = vpop.xlane.xlu0 %578
        %v580 = vsel %vm311, %v576, -inf
        %581 = vmax.xlane.f32.xlu0 %v580
        %v582 = vpop.xlane.xlu0 %581
        %v583 = vsub.f32 %v575, %v579
        %v584 = vsub.f32 %v576, %v582
        %v585 = vmul.f32 %v583, 1.442695
        %v586 = vpow.pop %v585
        %v587 = vmul.f32 %v584, 1.442695
        %v588 = vpow.pop %v587
        %v589 = vsel %vm311, %v586, 0.0
        %590 = vadd.xlane.f32.xlu0 %v589
        %v591 = vpop.xlane.xlu0 %590
        %v592 = vsel %vm311, %v588, 0.0
        %593 = vadd.xlane.f32.xlu0 %v592
        %v594 = vpop.xlane.xlu0 %593
        %v595 = vrcp.pop %v591
        %v596 = vrcp.pop %v594
        %v597 = vsel %vm318, %v595, 0.0
        %v598 = vsel %vm319, %v596, 0.0
        %v599 = vmul.f32 %v586, %v597
        %v600 = vmul.f32 %v588, %v598
        %s601 = scalar_lea.vmem %s278, 32 [#allocation8]
        %602 = vst.msk [vmem:[%s601] sm:$0xff] %vm311, %v599
        %603 = vst.msk [vmem:[%s601 + $0x8] sm:$0xff] %vm311, %v600
        %v604 = vld [vmem:[%s237] sm:$0xf]
        %v605 = vld [vmem:[%s237 + $0x4] sm:$0xf]
        %v606 = vld [vmem:[%s246] sm:$0xf]
        %v607 = vld [vmem:[%s246 + $0x4] sm:$0xf]
        %v610 = vunpack.c.l.b16 %v604
        %v611 = vunpack.c.l.b16 %v605
        %v612 = vpack.c.b16 %v611, %v610
        %613 = vrot.lane.b32.xlu0 %v612, 104
        %v614 = vpop.permute.xlu0 %613
        %v617 = vunpack.c.l.b16 %v606
        %v618 = vunpack.c.l.b16 %v607
        %v619 = vpack.c.b16 %v618, %v617
        %620 = vrot.lane.b32.xlu0 %v619, 104
        %v621 = vpop.permute.xlu0 %620
        %v623 = vsel %vm334, %v614, 0
        %v626 = vsel %vm334, %v621, 0
        %628 = vmatprep.subr.bf16.mxu0 0
        %629 = vmatpush1.bf16.xpose.msra.mxu0 %v626
        %630 = vmatprep.subr.bf16.mxu0 0
        %631 = vmatpush1.bf16.xpose.msra.mxu0 0
        %632 = vmatprep.subr.bf16.mxu0 0
        %633 = vmatpush1.bf16.xpose.msra.mxu0 0
        %634 = vmatprep.subr.bf16.mxu0 0
        %635 = vmatpush1.bf16.xpose.msra.mxu0 0
        %636 = vmatprep.subr.bf16.mxu0 0
        %637 = vmatpush1.bf16.xpose.msra.mxu0 0
        %638 = vmatprep.subr.bf16.mxu0 0
        %639 = vmatpush1.bf16.xpose.msra.mxu0 0
        %640 = vmatprep.subr.bf16.mxu0 0
        %641 = vmatpush1.bf16.xpose.msra.mxu0 0
        %642 = vmatprep.subr.bf16.mxu0 0
        %643 = vmatpush1.bf16.xpose.msra.mxu0 0
        %644 = vmatprep.subr.bf16.mxu0 0
        %645 = vmatpush1.bf16.xpose.msra.mxu0 0
        %646 = vmatprep.subr.bf16.mxu0 0
        %647 = vmatpush1.bf16.xpose.msra.mxu0 0
        %648 = vmatprep.subr.bf16.mxu0 0
        %649 = vmatpush1.bf16.xpose.msra.mxu0 0
        %650 = vmatprep.subr.bf16.mxu0 0
        %651 = vmatpush1.bf16.xpose.msra.mxu0 0
        %652 = vmatprep.subr.bf16.mxu0 0
        %653 = vmatpush1.bf16.xpose.msra.mxu0 0
        %654 = vmatprep.subr.bf16.mxu0 0
        %655 = vmatpush1.bf16.xpose.msra.mxu0 0
        %656 = vmatprep.subr.bf16.mxu0 0
        %657 = vmatpush1.bf16.xpose.msra.mxu0 0
        %658 = vmatprep.subr.bf16.mxu0 0
        %659 = vmatpush1.bf16.xpose.msra.mxu0 0
        %660 = vmatprep.mubr.bf16.mxu0 0
        %661 = vmatmul.mubr.bf16.gmra.mrb[0].mxu0 %v623
        %v662 = vpop.f32.mrb[0].mxu0
        %v663 = vadd.f32 0.0, %v662
        %v664 = vpop.f32.mrb[0].mxu0
        %v665 = vpop.f32.mrb[0].mxu0
        %v666 = vadd.f32 0.0, %v665
        %v667 = vpop.f32.mrb[0].mxu0
        %668 = vdwg.mxu0
        %v669 = vmul.f32 %v663, 0.35355338
        %v670 = vmul.f32 %v666, 0.35355338
        %v671 = vsel %vm309, %v669, -1e+30
        %v672 = vsel %vm310, %v670, -1e+30
        %v673 = vsel %vm311, %v671, -inf
        %674 = vmax.xlane.f32.xlu0 %v673
        %v675 = vpop.xlane.xlu0 %674
        %v676 = vsel %vm311, %v672, -inf
        %677 = vmax.xlane.f32.xlu0 %v676
        %v678 = vpop.xlane.xlu0 %677
        %v679 = vsub.f32 %v671, %v675
        %v680 = vsub.f32 %v672, %v678
        %v681 = vmul.f32 %v679, 1.442695
        %v682 = vpow.pop %v681
        %v683 = vmul.f32 %v680, 1.442695
        %v684 = vpow.pop %v683
        %v685 = vsel %vm311, %v682, 0.0
        %686 = vadd.xlane.f32.xlu0 %v685
        %v687 = vpop.xlane.xlu0 %686
        %v688 = vsel %vm311, %v684, 0.0
        %689 = vadd.xlane.f32.xlu0 %v688
        %v690 = vpop.xlane.xlu0 %689
        %v691 = vrcp.pop %v687
        %v692 = vrcp.pop %v690
        %v693 = vsel %vm318, %v691, 0.0
        %v694 = vsel %vm319, %v692, 0.0
        %v695 = vmul.f32 %v682, %v693
        %v696 = vmul.f32 %v684, %v694
        %s697 = scalar_lea.vmem %s278, 48 [#allocation8]
        %698 = vst.msk [vmem:[%s697] sm:$0xff] %vm311, %v695
        %699 = vst.msk [vmem:[%s697 + $0x8] sm:$0xff] %vm311, %v696
        %s700 = sand.u32 %s129, 1
        %s701 = scalar_lea.sflag [#allocation4], %s700
        %s702 = sand.u32 %s129, 1
        %s703 = smul.addr %s702, 64
        %s704 = scalar_lea.vmem [#allocation8], %s703
        // Predicated region
        $region49: #{tpu_custom_call.1} parent=35 // pred_check
          %p705 = pneg %p139
        $region50: #{tpu_custom_call.1} parent=35 // pred_check_branch
          %707 = sbr.rel (%p705) target = $region52
        $region51: #{tpu_custom_call.1} parent=35 // pred_region
          #allocation10 [shape = 'u32[6]{0}', space=smem, size = 0x18, scoped, tag = 'DMA stride descriptor']
          %s709 = ssub.s32 1024, 1024
          %710 = vsyncadd %s701, %s709
          %s711 = smul.addr %s22, 2
          %s712 = smul.addr %s711, 128
          %s713 = scalar_lea.hbm %s4, %s712
          %s715 = sshll.u32 1, 14
          %s716 = sxor.u32 4294967295, %s715
          %s719 = sshll.u32 7, 18
          %s720 = sxor.u32 4294967295, %s719
          %s721 = sand.u32 0, %s720
          %s723 = sor.u32 %s721, 0
          %s725 = sshll.u32 3, 24
          %s726 = sxor.u32 4294967295, %s725
          %s727 = sand.u32 %s723, %s726
          %s729 = sor.u32 %s727, 0
          %s730 = sshll.u32 %s704, 4
          %s731 = int_to_ptr.vmem [resolvable:$true] %s730
          %737 = sst [smem:[#allocation10]] 256
          %s738 = scalar_lea.smem [#allocation10], 1
          %739 = sst [smem:[%s738]] 512
          %s740 = scalar_lea.smem [#allocation10], 2
          %741 = sst [smem:[%s740]] 2
          %s742 = scalar_lea.smem [#allocation10], 3
          %743 = sst [smem:[%s742]] 128
          %s744 = scalar_lea.smem [#allocation10], 4
          %745 = sst [smem:[%s744]] 128
          %s746 = scalar_lea.smem [#allocation10], 5
          %747 = sst [smem:[%s746]] 8
          %749 = dma.general %s731, 1024, %s713, %s701, [#allocation9], [#allocation10], %s729, 0
        $region52: #{tpu_custom_call.1} parent=35 // pred_fallthru
          _
      $region36: #{tpu_custom_call.1} parent=5 // pred_fallthru
        _
      %p750 = scmp.le.s32.totalorder 2, %s17
      // Predicated region
      $region53: #{tpu_custom_call.1} parent=5 // pred_check
        %p751 = pneg %p750
      $region54: #{tpu_custom_call.1} parent=5 // pred_check_branch
        %753 = sbr.rel (%p751) target = $region56
      $region55: #{tpu_custom_call.1} parent=5 // pred_region
        %s754 = ssub.s32 %s17, 2
        // Predicated region
        $region57: #{tpu_custom_call.1} parent=55 // pred_check
          %p755 = pneg %p145
        $region58: #{tpu_custom_call.1} parent=55 // pred_check_branch
          %757 = sbr.rel (%p755) target = $region60
        $region59: #{tpu_custom_call.1} parent=55 // pred_region
          %s758 = sand.u32 %s130, 1
          %s759 = scalar_lea.sflag [#allocation4], %s758
          %s760 = sand.u32 %s130, 1
          %s761 = smul.addr %s760, 64
          %s762 = scalar_lea.vmem [#allocation8], %s761
          %763 = dma.done %s759, 1024
        $region60: #{tpu_custom_call.1} parent=55 // pred_fallthru
          _
      $region56: #{tpu_custom_call.1} parent=5 // pred_fallthru
        _
    $region6: #{tpu_custom_call.1} parent=1 // loop_footer
      %s21 = sadd.s32 1, %s17
    $region7: #{tpu_custom_call.1} parent=1 // loop_footer_branch
      %16 = sbr.rel target = $region3
    $region8: #{tpu_custom_call.1} parent=1 // loop_exit
      _
    %764 = vsyncpa [#allocation3], 1
    %s765 = scalar_lea.sflag [#allocation3], 1
    %766 = vsyncpa %s765, 1
    %767 = vsyncpa [#allocation6], 1
    %s768 = scalar_lea.sflag [#allocation6], 1
    %769 = vsyncpa %s768, 1
    %770 = vsyncpa [#allocation4], 1
    %s771 = scalar_lea.sflag [#allocation4], 1
    %772 = vsyncpa %s771, 1

</llo_original>
